<compile_context>
chip_gen: v7x
topology: tpu7x:2x2x1
jax: 0.10.0
libtpu: 0.0.40
codegen_flags: <defaults>
</compile_context>

<pallas_src>
import math

import jax
import jax.numpy as jnp
from jax.experimental import pallas as pl
from jax.experimental.pallas import tpu as pltpu


def _copy_kernel(x_ref, o_ref):
    # Straight copy of one lane-dense tile (the only "compute" in Vectorize).
    o_ref[...] = x_ref[...]


_LANE = 128
_TARGET_TILE_BYTES = 2 * 1024 * 1024  # ~2 MiB per buffer tile


def _sublane_multiple(itemsize):
    # f32 -> 8, bf16 -> 16, int8/fp8 -> 32 (sub-32-bit dtypes pack along sublanes).
    return {4: 8, 2: 16, 1: 32}.get(itemsize, 8)


def _pick_lane_dense_layout(total, itemsize):
    """Return (rows, lanes) with rows*lanes == total, lanes % 128 == 0 and
    rows a multiple of the sublane packing factor, or None if impossible."""
    sub = _sublane_multiple(itemsize)
    for lanes in range(4096, _LANE - 1, -_LANE):
        if total % lanes == 0:
            rows = total // lanes
            if rows % sub == 0:
                return rows, lanes
    return None


def vectorize(x, channels):
    """Pallas equivalent of Vectorize(channels)(x): (B, ...) -> (B, channels)."""
    b = x.shape[0]
    assert math.prod(x.shape[1:]) == channels, (
        "channels must equal prod of non-batch dims"
    )
    total = b * channels
    itemsize = jnp.dtype(x.dtype).itemsize
    sub = _sublane_multiple(itemsize)

    layout = _pick_lane_dense_layout(total, itemsize)
    if layout is None:
        # Fallback: single full-array block (still correct, just not lane-dense).
        rows, lanes = b, channels
    else:
        rows, lanes = layout

    # Row-major flatten to the lane-dense slab: metadata-only in XLA.
    x2d = x.reshape(rows, lanes)

    # Tile along rows, ~2 MiB per buffer, sublane-aligned.
    tile_rows = max(sub, (_TARGET_TILE_BYTES // (lanes * itemsize)) // sub * sub)
    tile_rows = min(tile_rows, rows)
    if layout is not None and rows % tile_rows != 0:
        # Prefer an even, sublane-aligned divisor of rows when available.
        d = tile_rows
        while d > sub and rows % d != 0:
            d -= sub
        if rows % d == 0:
            tile_rows = d
    grid = (pl.cdiv(rows, tile_rows),)

    out2d = pl.pallas_call(
        _copy_kernel,
        out_shape=jax.ShapeDtypeStruct((rows, lanes), x.dtype),
        grid=grid,
        in_specs=[pl.BlockSpec((tile_rows, lanes), lambda i: (i, 0))],
        out_specs=pl.BlockSpec((tile_rows, lanes), lambda i: (i, 0)),
        input_output_aliases={0: 0},
        compiler_params=pltpu.CompilerParams(
            dimension_semantics=("parallel",),
        ),
    )(x2d)

    # Back to the PyTorch output shape (another metadata-only view).
    return out2d.reshape(b, channels)


if __name__ == "__main__":
    # Small shapes consistent with the module: B=2, C=4, H=16, W=16.
    B, C, H, W = 2, 4, 16, 16
    channels = C * H * W  # Vectorize(channels)

    key = jax.random.PRNGKey(0)
    x = jax.random.normal(key, (B, C, H, W), dtype=jnp.float32)

    y = vectorize(x, channels)
    y = jax.block_until_ready(y)

    # Reference check against the pure-JAX semantics of the PyTorch module.
    y_ref = x.reshape(B, channels)
    assert y.shape == (B, channels)
    assert jnp.array_equal(y, y_ref)

    print("KERNEL_OK")
</pallas_src>

<mosaic_0001>
module attributes {stable_mosaic.version = 11 : i64} {
  func.func @_copy_kernel(%arg0: i32, %arg1: memref<8x256xf32, #tpu.memory_space<vmem>>, %arg2: memref<8x256xf32, #tpu.memory_space<vmem>>) attributes {dimension_semantics = [#tpu.dimension_semantics<parallel>], iteration_bounds = array<i64: 1>, scalar_prefetch = 0 : i64, scratch_operands = 0 : i64, tpu.core_type = #tpu.core_type<tc>, window_params = [{transform_indices = @transform_0, window_bounds = array<i64: 8, 256>}, {transform_indices = @transform_1, window_bounds = array<i64: 8, 256>}]} {
    %c0 = arith.constant 0 : index
    %c0_0 = arith.constant 0 : index
    %0 = vector.load %arg1[%c0, %c0_0] : memref<8x256xf32, #tpu.memory_space<vmem>>, vector<8x256xf32>
    %c0_1 = arith.constant 0 : index
    %c0_2 = arith.constant 0 : index
    %1 = vector.load %arg2[%c0_1, %c0_2] : memref<8x256xf32, #tpu.memory_space<vmem>>, vector<8x256xf32>
    tpu.vector_store %arg2[%c0_1, %c0_2], %0 {strides = array<i32>} : memref<8x256xf32, #tpu.memory_space<vmem>>, vector<8x256xf32>,
    return
  }
  func.func @transform_0(%arg0: i32) -> (i32, i32) {
    %c0_i32 = arith.constant 0 : i32
    %c0_i32_0 = arith.constant 0 : i32
    return %arg0, %c0_i32 : i32, i32
  }
  func.func @transform_1(%arg0: i32) -> (i32, i32) {
    %c0_i32 = arith.constant 0 : i32
    %c0_i32_0 = arith.constant 0 : i32
    return %arg0, %c0_i32 : i32, i32
  }
}

</mosaic_0001>

<llo_original>
// kernel: tpu_custom_call.1
$region0: #{tpu_custom_call.1}
  #allocation0 [shape = 'u32[]', space=smem, size = 0x4, offset = 0x4, fixed_abs, tag = 'smem constant byte address 0x4 - core index']
  #allocation1 [shape = 'u32[144,128]{1,0:T(1,128)}', space=vmem, size = 0x12000, scoped, tag = 'internal scratch']
  %s0 = inlined_call_operand.hbm [shape: f32[8,256], index: 0, kind: input, shape index: {}, may-alias: {0,1}]
  %s1 = inlined_call_operand.hbm [shape: f32[8,256], index: 1, kind: output, shape index: {}, may-alias: {0,1}]
  %s2 = sld [smem:[#allocation0]]
  $region18: #{tpu_custom_call.1} parent=0
    _
  %s4 = ssub.s32 1, %s2
  %s5 = scalar_select 0, %s4, %s2
  $region1: #{tpu_custom_call.1} parent=0
    #allocation2 [shape = 'u8[8192]{0}', space=vmem, size = 0x2000, scoped, tag = 'input window, operand 0, single buffered']
    #allocation3 [shape = 's32[1]{0}', space=sflag, size = 0x4, scoped, tag = 'scoped memory for tpu_custom_call.1']
    #allocation4 [shape = 's32[1]{0}', space=sflag, size = 0x4, scoped, tag = 'scoped memory for tpu_custom_call.1']
    #allocation5 [shape = 'u8[8192]{0}', space=vmem, size = 0x2000, scoped, tag = 'output window, operand 0, single buffered']
    %6 = vsyncpa [#allocation3], 0
    %7 = vsyncpa [#allocation4], 0
    // Predicated region
    $region2: #{tpu_custom_call.1} parent=1 // pred_check
      _
    $region3: #{tpu_custom_call.1} parent=1 // pred_check_branch
      %9 = sbr.rel (0) target = $region5
    $region4: #{tpu_custom_call.1} parent=1 // pred_region
      %s11 = ssub.s32 256, 256
      %12 = vsyncadd [#allocation3], %s11
      %s14 = sshll.u32 [#allocation2], 4
      %s15 = int_to_ptr.vmem [resolvable:$true] %s14
      %17 = dma.hbm_to_vmem [thread:$0]  %s0, 256, %s15, [#allocation3]
    $region5: #{tpu_custom_call.1} parent=1 // pred_fallthru
      _
    // Predicated region
    $region6: #{tpu_custom_call.1} parent=1 // pred_check
      _
    $region7: #{tpu_custom_call.1} parent=1 // pred_check_branch
      %19 = sbr.rel (0) target = $region9
    $region8: #{tpu_custom_call.1} parent=1 // pred_region
      %20 = dma.done [#allocation3], 256
    $region9: #{tpu_custom_call.1} parent=1 // pred_fallthru
      _
    %v21 = vld [vmem:[#allocation2] sm:$0xff]
    %v22 = vld [vmem:[#allocation2 + $0x8] sm:$0xff]
    %23 = vst [vmem:[#allocation5] sm:$0xff] %v21
    %24 = vst [vmem:[#allocation5 + $0x8] sm:$0xff] %v22
    // Predicated region
    $region10: #{tpu_custom_call.1} parent=1 // pred_check
      _
    $region11: #{tpu_custom_call.1} parent=1 // pred_check_branch
      %26 = sbr.rel (0) target = $region13
    $region12: #{tpu_custom_call.1} parent=1 // pred_region
      %s28 = ssub.s32 256, 256
      %29 = vsyncadd [#allocation4], %s28
      %s31 = sshll.u32 [#allocation5], 4
      %s32 = int_to_ptr.vmem [resolvable:$true] %s31
      %34 = dma.vmem_to_hbm [thread:$0]  %s32, 256, %s1, [#allocation4]
    $region13: #{tpu_custom_call.1} parent=1 // pred_fallthru
      _
    // Predicated region
    $region14: #{tpu_custom_call.1} parent=1 // pred_check
      _
    $region15: #{tpu_custom_call.1} parent=1 // pred_check_branch
      %36 = sbr.rel (0) target = $region17
    $region16: #{tpu_custom_call.1} parent=1 // pred_region
      %37 = dma.done [#allocation4], 256
    $region17: #{tpu_custom_call.1} parent=1 // pred_fallthru
      _
    %38 = vsyncpa [#allocation3], 1
    %39 = vsyncpa [#allocation4], 1

</llo_original>
